<compile_context>
chip_gen: v7x
topology: tpu7x:2x2x1
jax: 0.10.0
libtpu: 0.0.40
codegen_flags: <defaults>
</compile_context>

<pallas_src>
import jax
import jax.numpy as jnp
from jax import lax
from jax.experimental import pallas as pl
from jax.experimental.pallas import tpu as pltpu

EPS = 1e-5


def _basic_block_kernel(xpadh_ref, w1_ref, w2_ref, g1_ref, b1_ref, g2_ref,
                        b2_ref, m_ref, o_ref, midp_ref):
    # xpadh_ref: (N, H+2, WC)   H-zero-padded input, lane-dense (WC = W*C)
    # w1_ref/w2_ref: (3, WC, WC) block-banded 3x3 conv weights (one row-block per kh)
    # g*/b*:     (1, WC)        BatchNorm gamma/beta, pre-tiled across W
    # m_ref:     (WC, WC)       (1/(N*H*W)) * per-channel pool-and-broadcast matrix
    # o_ref:     (N*H, WC)      output (lane-dense)
    # midp_ref:  (N, 8+H+8, WC) scratch: H-padded intermediate, 8-row aligned halos
    NH, WC = o_ref.shape
    N, Hp2, _ = xpadh_ref.shape
    H = Hp2 - 2
    TOP = 8                                   # data rows start on an 8-row boundary

    m_mat = m_ref[...]                        # (WC, WC)

    def bn(a, gamma_ref, beta_ref):
        # Training-mode BN folded into one FMA: a*scale + bias.
        s = jnp.sum(a, axis=0, keepdims=True)                              # (1, WC)
        ss = jnp.sum(a * a, axis=0, keepdims=True)                         # (1, WC)
        mean_f = jnp.dot(s, m_mat, preferred_element_type=jnp.float32)     # per-chan mean, bcast
        e2_f = jnp.dot(ss, m_mat, preferred_element_type=jnp.float32)      # per-chan E[x^2]
        var_f = e2_f - mean_f * mean_f                                     # biased var
        scale_f = gamma_ref[...] * lax.rsqrt(var_f + EPS)                  # (1, WC)
        bias_f = beta_ref[...] - mean_f * scale_f                          # (1, WC)
        return a * scale_f + bias_f

    # --- conv1: three accumulating K=WC matmuls straight from the padded ref ---
    h1 = jnp.dot(xpadh_ref[:, 0:H, :].reshape(NH, WC), w1_ref[0],
                 preferred_element_type=jnp.float32)
    h1 = h1 + jnp.dot(xpadh_ref[:, 1:H + 1, :].reshape(NH, WC), w1_ref[1],
                      preferred_element_type=jnp.float32)
    h1 = h1 + jnp.dot(xpadh_ref[:, 2:H + 2, :].reshape(NH, WC), w1_ref[2],
                      preferred_element_type=jnp.float32)
    mid = jnp.maximum(bn(h1, g1_ref, b1_ref), 0.0)

    # --- re-pad along H through the aligned scratch (8-row halo blocks only) ---
    midp_ref[:, 0:TOP, :] = jnp.zeros((N, TOP, WC), jnp.float32)
    midp_ref[:, TOP + H:TOP + H + 8, :] = jnp.zeros((N, 8, WC), jnp.float32)
    midp_ref[:, TOP:TOP + H, :] = mid.reshape(N, H, WC)        # 8-aligned bulk store

    # --- conv2: three accumulating matmuls on the shifted H-windows ---
    h2 = jnp.dot(midp_ref[:, TOP - 1:TOP - 1 + H, :].reshape(NH, WC), w2_ref[0],
                 preferred_element_type=jnp.float32)
    h2 = h2 + jnp.dot(midp_ref[:, TOP:TOP + H, :].reshape(NH, WC), w2_ref[1],
                      preferred_element_type=jnp.float32)
    h2 = h2 + jnp.dot(midp_ref[:, TOP + 1:TOP + 1 + H, :].reshape(NH, WC), w2_ref[2],
                      preferred_element_type=jnp.float32)
    out = bn(h2, g2_ref, b2_ref)

    # --- residual (fresh slice of the padded input, middle kh window) + relu ---
    identity = xpadh_ref[:, 1:H + 1, :].reshape(NH, WC)
    o_ref[...] = jnp.maximum(out + identity, 0.0).astype(o_ref.dtype)


def _band_conv_weights(w_hwio, width):
    """(3, 3, Cin, Cout) HWIO -> (3, W*Cin, W*Cout) block-banded matrices.

    block[kh][w_in*Cin + ci, w_out*Cout + co] = w[kh, w_in - w_out + 1, ci, co]
    when the horizontal offset lies in the 3-tap band (zero otherwise); the
    band structure encodes the zero padding along W.  Pure 0/1 scatter of the
    weights (layout plumbing), done once in the wrapper.
    """
    _, _, cin, cout = w_hwio.shape
    wc_in, wc_out = width * cin, width * cout
    blocks = []
    for kh in range(3):
        band = jnp.zeros((wc_in, wc_out), w_hwio.dtype)
        for kw in range(3):
            # shift[w_in, w_out] = 1  iff  w_in == w_out + kw - 1
            shift = jnp.eye(width, k=1 - kw, dtype=w_hwio.dtype)
            band = band + jnp.einsum('ac,bd->abcd', shift,
                                     w_hwio[kh, kw]).reshape(wc_in, wc_out)
        blocks.append(band)
    return jnp.stack(blocks, axis=0)


@jax.jit
def basic_block_forward(x_nchw, w1, g1, b1, w2, g2, b2):
    """x_nchw: (N, C, H, W) f32; w*: (3, 3, C, C) HWIO; g*/b*: (C,)."""
    N, C, H, W = x_nchw.shape
    WC = W * C

    # NCHW -> lane-dense rows (N, H, W*C), zero-padded along H only (18 KiB in,
    # instead of a 48 KiB pre-built im2col).
    x_rows = jnp.transpose(x_nchw, (0, 2, 3, 1)).reshape(N, H, WC)
    xpadh = jnp.pad(x_rows, ((0, 0), (1, 1), (0, 0)))                # (N, H+2, WC)

    w1b = _band_conv_weights(w1, W)                                  # (3, WC, WC)
    w2b = _band_conv_weights(w2, W)

    # gamma/beta pre-tiled across W: lane w*C + c holds g[c].
    g1t = jnp.tile(g1.reshape(1, C), (1, W))
    b1t = jnp.tile(b1.reshape(1, C), (1, W))
    g2t = jnp.tile(g2.reshape(1, C), (1, W))
    b2t = jnp.tile(b2.reshape(1, C), (1, W))

    # Combined pool-and-broadcast averaging matrix for the folded W*C lane axis:
    # M[w*C+c, w'*C+c'] = delta(c, c') / (N*H*W).
    pool = jnp.tile(jnp.eye(C, dtype=jnp.float32), (W, 1))           # (WC, C)
    m_mat = (pool @ pool.T) / float(N * H * W)                       # (WC, WC)

    out = pl.pallas_call(
        _basic_block_kernel,
        out_shape=jax.ShapeDtypeStruct((N * H, WC), jnp.float32),
        in_specs=[pl.BlockSpec(memory_space=pltpu.MemorySpace.VMEM)] * 8,
        out_specs=pl.BlockSpec(memory_space=pltpu.MemorySpace.VMEM),
        scratch_shapes=[pltpu.VMEM((N, 8 + H + 8, WC), jnp.float32)],
    )(xpadh, w1b, w2b, g1t, b1t, g2t, b2t, m_mat)

    # lane-dense (N*H, W*C) back to NCHW
    return jnp.transpose(out.reshape(N, H, W, C), (0, 3, 1, 2))


def _reference_forward(x_nchw, w1, g1, b1, w2, g2, b2):
    """Pure-JAX reference (mirrors the PyTorch module in train-mode BN)."""
    def conv(x, w_hwio):
        w_oihw = jnp.transpose(w_hwio, (3, 2, 0, 1))
        return lax.conv_general_dilated(
            x, w_oihw, window_strides=(1, 1), padding=((1, 1), (1, 1)),
            dimension_numbers=('NCHW', 'OIHW', 'NCHW'))

    def bn(x, g, b):
        mean = jnp.mean(x, axis=(0, 2, 3), keepdims=True)
        var = jnp.mean((x - mean) ** 2, axis=(0, 2, 3), keepdims=True)
        return ((x - mean) / jnp.sqrt(var + EPS)) * g.reshape(1, -1, 1, 1) \
               + b.reshape(1, -1, 1, 1)

    out = jax.nn.relu(bn(conv(x_nchw, w1), g1, b1))
    out = bn(conv(out, w2), g2, b2)
    return jax.nn.relu(out + x_nchw)


if __name__ == "__main__":
    # BasicBlock(inplanes=8, planes=8, stride=1, downsample=None)
    # W*C = 16*8 = 128 -> fully lane-dense kernel layout.
    N, C, H, W = 2, 8, 16, 16

    key = jax.random.PRNGKey(0)
    k1, k2, k3, k4, k5, k6, kx = jax.random.split(key, 7)

    fan_in = 3 * 3 * C
    w1 = jax.random.normal(k1, (3, 3, C, C), jnp.float32) * (2.0 / fan_in) ** 0.5
    w2 = jax.random.normal(k2, (3, 3, C, C), jnp.float32) * (2.0 / fan_in) ** 0.5
    g1 = 1.0 + 0.1 * jax.random.normal(k3, (C,), jnp.float32)
    b1 = 0.1 * jax.random.normal(k4, (C,), jnp.float32)
    g2 = 1.0 + 0.1 * jax.random.normal(k5, (C,), jnp.float32)
    b2 = 0.1 * jax.random.normal(k6, (C,), jnp.float32)

    x = jax.random.normal(kx, (N, C, H, W), jnp.float32)

    out = basic_block_forward(x, w1, g1, b1, w2, g2, b2)
    out = jax.block_until_ready(out)

    ref = _reference_forward(x, w1, g1, b1, w2, g2, b2)
    assert out.shape == (N, C, H, W)
    assert jnp.allclose(out, ref, atol=1e-4, rtol=1e-4), \
        f"max abs err = {jnp.max(jnp.abs(out - ref))}"

    print("KERNEL_OK")
</pallas_src>

<mosaic_0001>
module attributes {stable_mosaic.version = 11 : i64} {
  func.func @_basic_block_kernel(%arg0: memref<2x18x128xf32, #tpu.memory_space<vmem>>, %arg1: memref<3x128x128xf32, #tpu.memory_space<vmem>>, %arg2: memref<3x128x128xf32, #tpu.memory_space<vmem>>, %arg3: memref<1x128xf32, #tpu.memory_space<vmem>>, %arg4: memref<1x128xf32, #tpu.memory_space<vmem>>, %arg5: memref<1x128xf32, #tpu.memory_space<vmem>>, %arg6: memref<1x128xf32, #tpu.memory_space<vmem>>, %arg7: memref<128x128xf32, #tpu.memory_space<vmem>>, %arg8: memref<32x128xf32, #tpu.memory_space<vmem>>, %arg9: memref<2x32x128xf32, #tpu.memory_space<vmem>>) attributes {dimension_semantics = [], scalar_prefetch = 0 : i64, scratch_operands = 1 : i64, tpu.core_type = #tpu.core_type<tc>} {
    %c0 = arith.constant 0 : index
    %c0_0 = arith.constant 0 : index
    %0 = vector.load %arg7[%c0, %c0_0] : memref<128x128xf32, #tpu.memory_space<vmem>>, vector<128x128xf32>
    %c0_1 = arith.constant 0 : index
    %c0_2 = arith.constant 0 : index
    %c0_3 = arith.constant 0 : index
    %1 = vector.load %arg0[%c0_1, %c0_2, %c0_3] : memref<2x18x128xf32, #tpu.memory_space<vmem>>, vector<2x16x128xf32>
    %2 = vector.shape_cast %1 : vector<2x16x128xf32> to vector<32x128xf32>
    %c0_4 = arith.constant 0 : index
    %c0_5 = arith.constant 0 : index
    %c0_6 = arith.constant 0 : index
    %3 = vector.load %arg1[%c0_4, %c0_5, %c0_6] : memref<3x128x128xf32, #tpu.memory_space<vmem>>, vector<1x128x128xf32>
    %4 = vector.shape_cast %3 : vector<1x128x128xf32> to vector<128x128xf32>
    %cst = arith.constant dense<0.000000e+00> : vector<32x128xf32>
    %5 = tpu.matmul %2, %4, %cst {dimension_numbers = #tpu.dot_dimension_numbers<[1], [0], [0], [1], [0, 0, 1, 1], [], []>} : vector<32x128xf32>, vector<128x128xf32>, vector<32x128xf32> -> vector<32x128xf32>
    %c0_7 = arith.constant 0 : index
    %c1 = arith.constant 1 : index
    %c0_8 = arith.constant 0 : index
    %6 = vector.load %arg0[%c0_7, %c1, %c0_8] : memref<2x18x128xf32, #tpu.memory_space<vmem>>, vector<2x16x128xf32>
    %7 = vector.shape_cast %6 : vector<2x16x128xf32> to vector<32x128xf32>
    %c1_9 = arith.constant 1 : index
    %c0_10 = arith.constant 0 : index
    %c0_11 = arith.constant 0 : index
    %8 = vector.load %arg1[%c1_9, %c0_10, %c0_11] : memref<3x128x128xf32, #tpu.memory_space<vmem>>, vector<1x128x128xf32>
    %9 = vector.shape_cast %8 : vector<1x128x128xf32> to vector<128x128xf32>
    %cst_12 = arith.constant dense<0.000000e+00> : vector<32x128xf32>
    %10 = tpu.matmul %7, %9, %cst_12 {dimension_numbers = #tpu.dot_dimension_numbers<[1], [0], [0], [1], [0, 0, 1, 1], [], []>} : vector<32x128xf32>, vector<128x128xf32>, vector<32x128xf32> -> vector<32x128xf32>
    %11 = arith.addf %5, %10 : vector<32x128xf32>
    %c0_13 = arith.constant 0 : index
    %c2 = arith.constant 2 : index
    %c0_14 = arith.constant 0 : index
    %12 = vector.load %arg0[%c0_13, %c2, %c0_14] : memref<2x18x128xf32, #tpu.memory_space<vmem>>, vector<2x16x128xf32>
    %13 = vector.shape_cast %12 : vector<2x16x128xf32> to vector<32x128xf32>
    %c2_15 = arith.constant 2 : index
    %c0_16 = arith.constant 0 : index
    %c0_17 = arith.constant 0 : index
    %14 = vector.load %arg1[%c2_15, %c0_16, %c0_17] : memref<3x128x128xf32, #tpu.memory_space<vmem>>, vector<1x128x128xf32>
    %15 = vector.shape_cast %14 : vector<1x128x128xf32> to vector<128x128xf32>
    %cst_18 = arith.constant dense<0.000000e+00> : vector<32x128xf32>
    %16 = tpu.matmul %13, %15, %cst_18 {dimension_numbers = #tpu.dot_dimension_numbers<[1], [0], [0], [1], [0, 0, 1, 1], [], []>} : vector<32x128xf32>, vector<128x128xf32>, vector<32x128xf32> -> vector<32x128xf32>
    %17 = arith.addf %11, %16 : vector<32x128xf32>
    %cst_19 = arith.constant dense<0.000000e+00> : vector<128xf32>
    %18 = vector.multi_reduction <add>, %17, %cst_19 [0] : vector<32x128xf32> to vector<128xf32>
    %19 = vector.shape_cast %18 : vector<128xf32> to vector<1x128xf32>
    %20 = arith.mulf %17, %17 : vector<32x128xf32>
    %cst_20 = arith.constant dense<0.000000e+00> : vector<128xf32>
    %21 = vector.multi_reduction <add>, %20, %cst_20 [0] : vector<32x128xf32> to vector<128xf32>
    %22 = vector.shape_cast %21 : vector<128xf32> to vector<1x128xf32>
    %cst_21 = arith.constant dense<0.000000e+00> : vector<1x128xf32>
    %23 = tpu.matmul %19, %0, %cst_21 {dimension_numbers = #tpu.dot_dimension_numbers<[1], [0], [0], [1], [0, 0, 1, 1], [], []>} : vector<1x128xf32>, vector<128x128xf32>, vector<1x128xf32> -> vector<1x128xf32>
    %cst_22 = arith.constant dense<0.000000e+00> : vector<1x128xf32>
    %24 = tpu.matmul %22, %0, %cst_22 {dimension_numbers = #tpu.dot_dimension_numbers<[1], [0], [0], [1], [0, 0, 1, 1], [], []>} : vector<1x128xf32>, vector<128x128xf32>, vector<1x128xf32> -> vector<1x128xf32>
    %25 = arith.mulf %23, %23 : vector<1x128xf32>
    %26 = arith.subf %24, %25 : vector<1x128xf32>
    %c0_23 = arith.constant 0 : index
    %c0_24 = arith.constant 0 : index
    %27 = vector.load %arg3[%c0_23, %c0_24] : memref<1x128xf32, #tpu.memory_space<vmem>>, vector<1x128xf32>
    %cst_25 = arith.constant 9.99999974E-6 : f32
    %28 = vector.broadcast %cst_25 : f32 to vector<1x128xf32>
    %29 = arith.addf %26, %28 : vector<1x128xf32>
    %30 = math.rsqrt %29 : vector<1x128xf32>
    %31 = arith.mulf %27, %30 : vector<1x128xf32>
    %c0_26 = arith.constant 0 : index
    %c0_27 = arith.constant 0 : index
    %32 = vector.load %arg4[%c0_26, %c0_27] : memref<1x128xf32, #tpu.memory_space<vmem>>, vector<1x128xf32>
    %33 = arith.mulf %23, %31 : vector<1x128xf32>
    %34 = arith.subf %32, %33 : vector<1x128xf32>
    %35 = vector.broadcast %31 : vector<1x128xf32> to vector<32x128xf32>
    %36 = arith.mulf %17, %35 : vector<32x128xf32>
    %37 = vector.broadcast %34 : vector<1x128xf32> to vector<32x128xf32>
    %38 = arith.addf %36, %37 : vector<32x128xf32>
    %cst_28 = arith.constant 0.000000e+00 : f32
    %39 = vector.broadcast %cst_28 : f32 to vector<32x128xf32>
    %40 = arith.maximumf %38, %39 : vector<32x128xf32>
    %cst_29 = arith.constant 0.000000e+00 : f32
    %41 = vector.broadcast %cst_29 : f32 to vector<2x8x128xf32>
    %c0_30 = arith.constant 0 : index
    %c0_31 = arith.constant 0 : index
    %c0_32 = arith.constant 0 : index
    %42 = vector.load %arg9[%c0_30, %c0_31, %c0_32] : memref<2x32x128xf32, #tpu.memory_space<vmem>>, vector<2x8x128xf32>
    tpu.vector_store %arg9[%c0_30, %c0_31, %c0_32], %41 {strides = array<i32>} : memref<2x32x128xf32, #tpu.memory_space<vmem>>, vector<2x8x128xf32>,
    %cst_33 = arith.constant 0.000000e+00 : f32
    %43 = vector.broadcast %cst_33 : f32 to vector<2x8x128xf32>
    %c0_34 = arith.constant 0 : index
    %c24 = arith.constant 24 : index
    %c0_35 = arith.constant 0 : index
    %44 = vector.load %arg9[%c0_34, %c24, %c0_35] : memref<2x32x128xf32, #tpu.memory_space<vmem>>, vector<2x8x128xf32>
    tpu.vector_store %arg9[%c0_34, %c24, %c0_35], %43 {strides = array<i32>} : memref<2x32x128xf32, #tpu.memory_space<vmem>>, vector<2x8x128xf32>,
    %45 = vector.shape_cast %40 : vector<32x128xf32> to vector<2x16x128xf32>
    %c0_36 = arith.constant 0 : index
    %c8 = arith.constant 8 : index
    %c0_37 = arith.constant 0 : index
    %46 = vector.load %arg9[%c0_36, %c8, %c0_37] : memref<2x32x128xf32, #tpu.memory_space<vmem>>, vector<2x16x128xf32>
    tpu.vector_store %arg9[%c0_36, %c8, %c0_37], %45 {strides = array<i32>} : memref<2x32x128xf32, #tpu.memory_space<vmem>>, vector<2x16x128xf32>,
    %c0_38 = arith.constant 0 : index
    %c7 = arith.constant 7 : index
    %c0_39 = arith.constant 0 : index
    %47 = vector.load %arg9[%c0_38, %c7, %c0_39] : memref<2x32x128xf32, #tpu.memory_space<vmem>>, vector<2x16x128xf32>
    %48 = vector.shape_cast %47 : vector<2x16x128xf32> to vector<32x128xf32>
    %c0_40 = arith.constant 0 : index
    %c0_41 = arith.constant 0 : index
    %c0_42 = arith.constant 0 : index
    %49 = vector.load %arg2[%c0_40, %c0_41, %c0_42] : memref<3x128x128xf32, #tpu.memory_space<vmem>>, vector<1x128x128xf32>
    %50 = vector.shape_cast %49 : vector<1x128x128xf32> to vector<128x128xf32>
    %cst_43 = arith.constant dense<0.000000e+00> : vector<32x128xf32>
    %51 = tpu.matmul %48, %50, %cst_43 {dimension_numbers = #tpu.dot_dimension_numbers<[1], [0], [0], [1], [0, 0, 1, 1], [], []>} : vector<32x128xf32>, vector<128x128xf32>, vector<32x128xf32> -> vector<32x128xf32>
    %c0_44 = arith.constant 0 : index
    %c8_45 = arith.constant 8 : index
    %c0_46 = arith.constant 0 : index
    %52 = vector.load %arg9[%c0_44, %c8_45, %c0_46] : memref<2x32x128xf32, #tpu.memory_space<vmem>>, vector<2x16x128xf32>
    %53 = vector.shape_cast %52 : vector<2x16x128xf32> to vector<32x128xf32>
    %c1_47 = arith.constant 1 : index
    %c0_48 = arith.constant 0 : index
    %c0_49 = arith.constant 0 : index
    %54 = vector.load %arg2[%c1_47, %c0_48, %c0_49] : memref<3x128x128xf32, #tpu.memory_space<vmem>>, vector<1x128x128xf32>
    %55 = vector.shape_cast %54 : vector<1x128x128xf32> to vector<128x128xf32>
    %cst_50 = arith.constant dense<0.000000e+00> : vector<32x128xf32>
    %56 = tpu.matmul %53, %55, %cst_50 {dimension_numbers = #tpu.dot_dimension_numbers<[1], [0], [0], [1], [0, 0, 1, 1], [], []>} : vector<32x128xf32>, vector<128x128xf32>, vector<32x128xf32> -> vector<32x128xf32>
    %57 = arith.addf %51, %56 : vector<32x128xf32>
    %c0_51 = arith.constant 0 : index
    %c9 = arith.constant 9 : index
    %c0_52 = arith.constant 0 : index
    %58 = vector.load %arg9[%c0_51, %c9, %c0_52] : memref<2x32x128xf32, #tpu.memory_space<vmem>>, vector<2x16x128xf32>
    %59 = vector.shape_cast %58 : vector<2x16x128xf32> to vector<32x128xf32>
    %c2_53 = arith.constant 2 : index
    %c0_54 = arith.constant 0 : index
    %c0_55 = arith.constant 0 : index
    %60 = vector.load %arg2[%c2_53, %c0_54, %c0_55] : memref<3x128x128xf32, #tpu.memory_space<vmem>>, vector<1x128x128xf32>
    %61 = vector.shape_cast %60 : vector<1x128x128xf32> to vector<128x128xf32>
    %cst_56 = arith.constant dense<0.000000e+00> : vector<32x128xf32>
    %62 = tpu.matmul %59, %61, %cst_56 {dimension_numbers = #tpu.dot_dimension_numbers<[1], [0], [0], [1], [0, 0, 1, 1], [], []>} : vector<32x128xf32>, vector<128x128xf32>, vector<32x128xf32> -> vector<32x128xf32>
    %63 = arith.addf %57, %62 : vector<32x128xf32>
    %cst_57 = arith.constant dense<0.000000e+00> : vector<128xf32>
    %64 = vector.multi_reduction <add>, %63, %cst_57 [0] : vector<32x128xf32> to vector<128xf32>
    %65 = vector.shape_cast %64 : vector<128xf32> to vector<1x128xf32>
    %66 = arith.mulf %63, %63 : vector<32x128xf32>
    %cst_58 = arith.constant dense<0.000000e+00> : vector<128xf32>
    %67 = vector.multi_reduction <add>, %66, %cst_58 [0] : vector<32x128xf32> to vector<128xf32>
    %68 = vector.shape_cast %67 : vector<128xf32> to vector<1x128xf32>
    %cst_59 = arith.constant dense<0.000000e+00> : vector<1x128xf32>
    %69 = tpu.matmul %65, %0, %cst_59 {dimension_numbers = #tpu.dot_dimension_numbers<[1], [0], [0], [1], [0, 0, 1, 1], [], []>} : vector<1x128xf32>, vector<128x128xf32>, vector<1x128xf32> -> vector<1x128xf32>
    %cst_60 = arith.constant dense<0.000000e+00> : vector<1x128xf32>
    %70 = tpu.matmul %68, %0, %cst_60 {dimension_numbers = #tpu.dot_dimension_numbers<[1], [0], [0], [1], [0, 0, 1, 1], [], []>} : vector<1x128xf32>, vector<128x128xf32>, vector<1x128xf32> -> vector<1x128xf32>
    %71 = arith.mulf %69, %69 : vector<1x128xf32>
    %72 = arith.subf %70, %71 : vector<1x128xf32>
    %c0_61 = arith.constant 0 : index
    %c0_62 = arith.constant 0 : index
    %73 = vector.load %arg5[%c0_61, %c0_62] : memref<1x128xf32, #tpu.memory_space<vmem>>, vector<1x128xf32>
    %cst_63 = arith.constant 9.99999974E-6 : f32
    %74 = vector.broadcast %cst_63 : f32 to vector<1x128xf32>
    %75 = arith.addf %72, %74 : vector<1x128xf32>
    %76 = math.rsqrt %75 : vector<1x128xf32>
    %77 = arith.mulf %73, %76 : vector<1x128xf32>
    %c0_64 = arith.constant 0 : index
    %c0_65 = arith.constant 0 : index
    %78 = vector.load %arg6[%c0_64, %c0_65] : memref<1x128xf32, #tpu.memory_space<vmem>>, vector<1x128xf32>
    %79 = arith.mulf %69, %77 : vector<1x128xf32>
    %80 = arith.subf %78, %79 : vector<1x128xf32>
    %81 = vector.broadcast %77 : vector<1x128xf32> to vector<32x128xf32>
    %82 = arith.mulf %63, %81 : vector<32x128xf32>
    %83 = vector.broadcast %80 : vector<1x128xf32> to vector<32x128xf32>
    %84 = arith.addf %82, %83 : vector<32x128xf32>
    %c0_66 = arith.constant 0 : index
    %c1_67 = arith.constant 1 : index
    %c0_68 = arith.constant 0 : index
    %85 = vector.load %arg0[%c0_66, %c1_67, %c0_68] : memref<2x18x128xf32, #tpu.memory_space<vmem>>, vector<2x16x128xf32>
    %86 = vector.shape_cast %85 : vector<2x16x128xf32> to vector<32x128xf32>
    %87 = arith.addf %84, %86 : vector<32x128xf32>
    %cst_69 = arith.constant 0.000000e+00 : f32
    %88 = vector.broadcast %cst_69 : f32 to vector<32x128xf32>
    %89 = arith.maximumf %87, %88 : vector<32x128xf32>
    %c0_70 = arith.constant 0 : index
    %c0_71 = arith.constant 0 : index
    %90 = vector.load %arg8[%c0_70, %c0_71] : memref<32x128xf32, #tpu.memory_space<vmem>>, vector<32x128xf32>
    tpu.vector_store %arg8[%c0_70, %c0_71], %89 {strides = array<i32>} : memref<32x128xf32, #tpu.memory_space<vmem>>, vector<32x128xf32>,
    return
  }
}

</mosaic_0001>

<llo_original>
// kernel: basic_block_forward.1
$region0: #{basic_block_forward.1}
  #allocation0 [shape = 'u32[]', space=smem, size = 0x4, offset = 0x4, fixed_abs, tag = 'smem constant byte address 0x4 - core index']
  #allocation1 [shape = 'u32[144,128]{1,0:T(1,128)}', space=vmem, size = 0x12000, scoped, tag = 'internal scratch']
  #allocation2 [shape = 'f32[2,32,128]{2,1,0:T(8,128)}', space=vmem, size = 0x8000, scoped, tag = 'scratch operand']
  %s0 = inlined_call_operand.vmem [shape: f32[2,18,128], index: 0, kind: input, shape index: {}]
  %s1 = inlined_call_operand.vmem [shape: f32[3,128,128], index: 1, kind: input, shape index: {}]
  %s2 = inlined_call_operand.vmem [shape: f32[3,128,128], index: 2, kind: input, shape index: {}]
  %s3 = inlined_call_operand.vmem [shape: f32[1,128], index: 3, kind: input, shape index: {}]
  %s4 = inlined_call_operand.vmem [shape: f32[1,128], index: 4, kind: input, shape index: {}]
  %s5 = inlined_call_operand.vmem [shape: f32[1,128], index: 5, kind: input, shape index: {}]
  %s6 = inlined_call_operand.vmem [shape: f32[1,128], index: 6, kind: input, shape index: {}]
  %s7 = inlined_call_operand.vmem [shape: f32[128,128], index: 7, kind: input, shape index: {}]
  %s8 = inlined_call_operand.vmem [shape: f32[32,128], index: 8, kind: output, shape index: {}]
  %s9 = sld [smem:[#allocation0]]
  $region42: #{basic_block_forward.1} parent=0
    _
  %s11 = ssub.s32 1, %s9
  %s12 = scalar_select 0, %s11, %s9
  // Predicated region
  $region2: #{basic_block_forward.1} parent=0 // pred_check
    _
  $region3: #{basic_block_forward.1} parent=0 // pred_check_branch
    %14 = sbr.rel (0) target = $region5
  $region4: #{basic_block_forward.1} parent=0 // pred_region
    _
  $region5: #{basic_block_forward.1} parent=0 // pred_fallthru
    _
  // Predicated region
  $region6: #{basic_block_forward.1} parent=0 // pred_check
    _
  $region7: #{basic_block_forward.1} parent=0 // pred_check_branch
    %16 = sbr.rel (0) target = $region9
  $region8: #{basic_block_forward.1} parent=0 // pred_region
    _
  $region9: #{basic_block_forward.1} parent=0 // pred_fallthru
    _
  // Predicated region
  $region10: #{basic_block_forward.1} parent=0 // pred_check
    _
  $region11: #{basic_block_forward.1} parent=0 // pred_check_branch
    %18 = sbr.rel (0) target = $region13
  $region12: #{basic_block_forward.1} parent=0 // pred_region
    _
  $region13: #{basic_block_forward.1} parent=0 // pred_fallthru
    _
  // Predicated region
  $region14: #{basic_block_forward.1} parent=0 // pred_check
    _
  $region15: #{basic_block_forward.1} parent=0 // pred_check_branch
    %20 = sbr.rel (0) target = $region17
  $region16: #{basic_block_forward.1} parent=0 // pred_region
    _
  $region17: #{basic_block_forward.1} parent=0 // pred_fallthru
    _
  // Predicated region
  $region18: #{basic_block_forward.1} parent=0 // pred_check
    _
  $region19: #{basic_block_forward.1} parent=0 // pred_check_branch
    %22 = sbr.rel (0) target = $region21
  $region20: #{basic_block_forward.1} parent=0 // pred_region
    _
  $region21: #{basic_block_forward.1} parent=0 // pred_fallthru
    _
  // Predicated region
  $region22: #{basic_block_forward.1} parent=0 // pred_check
    _
  $region23: #{basic_block_forward.1} parent=0 // pred_check_branch
    %24 = sbr.rel (0) target = $region25
  $region24: #{basic_block_forward.1} parent=0 // pred_region
    _
  $region25: #{basic_block_forward.1} parent=0 // pred_fallthru
    _
  // Predicated region
  $region26: #{basic_block_forward.1} parent=0 // pred_check
    _
  $region27: #{basic_block_forward.1} parent=0 // pred_check_branch
    %26 = sbr.rel (0) target = $region29
  $region28: #{basic_block_forward.1} parent=0 // pred_region
    _
  $region29: #{basic_block_forward.1} parent=0 // pred_fallthru
    _
  // Predicated region
  $region30: #{basic_block_forward.1} parent=0 // pred_check
    _
  $region31: #{basic_block_forward.1} parent=0 // pred_check_branch
    %28 = sbr.rel (0) target = $region33
  $region32: #{basic_block_forward.1} parent=0 // pred_region
    _
  $region33: #{basic_block_forward.1} parent=0 // pred_fallthru
    _
  %v29 = vld [vmem:[%s7] sm:$0xff]
  %v30 = vld [vmem:[%s7 + $0x8] sm:$0xff]
  %v31 = vld [vmem:[%s7 + $0x10] sm:$0xff]
  %v32 = vld [vmem:[%s7 + $0x18] sm:$0xff]
  %v33 = vld [vmem:[%s7 + $0x20] sm:$0xff]
  %v34 = vld [vmem:[%s7 + $0x28] sm:$0xff]
  %v35 = vld [vmem:[%s7 + $0x30] sm:$0xff]
  %v36 = vld [vmem:[%s7 + $0x38] sm:$0xff]
  %v37 = vld [vmem:[%s7 + $0x40] sm:$0xff]
  %v38 = vld [vmem:[%s7 + $0x48] sm:$0xff]
  %v39 = vld [vmem:[%s7 + $0x50] sm:$0xff]
  %v40 = vld [vmem:[%s7 + $0x58] sm:$0xff]
  %v41 = vld [vmem:[%s7 + $0x60] sm:$0xff]
  %v42 = vld [vmem:[%s7 + $0x68] sm:$0xff]
  %v43 = vld [vmem:[%s7 + $0x70] sm:$0xff]
  %v44 = vld [vmem:[%s7 + $0x78] sm:$0xff]
  %v45 = vld [vmem:[%s0] sm:$0xff]
  %v46 = vld [vmem:[%s0 + $0x8] sm:$0xff]
  %v47 = vld [vmem:[%s0 + $0x18] sm:$0xff]
  %v48 = vld [vmem:[%s0 + $0x20] sm:$0xff]
  %v49 = vld [vmem:[%s1] sm:$0xff]
  %v50 = vld [vmem:[%s1 + $0x8] sm:$0xff]
  %v51 = vld [vmem:[%s1 + $0x10] sm:$0xff]
  %v52 = vld [vmem:[%s1 + $0x18] sm:$0xff]
  %v53 = vld [vmem:[%s1 + $0x20] sm:$0xff]
  %v54 = vld [vmem:[%s1 + $0x28] sm:$0xff]
  %v55 = vld [vmem:[%s1 + $0x30] sm:$0xff]
  %v56 = vld [vmem:[%s1 + $0x38] sm:$0xff]
  %v57 = vld [vmem:[%s1 + $0x40] sm:$0xff]
  %v58 = vld [vmem:[%s1 + $0x48] sm:$0xff]
  %v59 = vld [vmem:[%s1 + $0x50] sm:$0xff]
  %v60 = vld [vmem:[%s1 + $0x58] sm:$0xff]
  %v61 = vld [vmem:[%s1 + $0x60] sm:$0xff]
  %v62 = vld [vmem:[%s1 + $0x68] sm:$0xff]
  %v63 = vld [vmem:[%s1 + $0x70] sm:$0xff]
  %v64 = vld [vmem:[%s1 + $0x78] sm:$0xff]
  %v65 = vld [vmem:[%s0 + $0x1] sm:$0xff]
  %v66 = vld [vmem:[%s0 + $0x9] sm:$0xff]
  %v67 = vld [vmem:[%s0 + $0x19] sm:$0xff]
  %v68 = vld [vmem:[%s0 + $0x21] sm:$0xff]
  %s69 = scalar_lea.vmem %s1, 128
  %v70 = vld [vmem:[%s69] sm:$0xff]
  %v71 = vld [vmem:[%s69 + $0x8] sm:$0xff]
  %v72 = vld [vmem:[%s69 + $0x10] sm:$0xff]
  %v73 = vld [vmem:[%s69 + $0x18] sm:$0xff]
  %v74 = vld [vmem:[%s69 + $0x20] sm:$0xff]
  %v75 = vld [vmem:[%s69 + $0x28] sm:$0xff]
  %v76 = vld [vmem:[%s69 + $0x30] sm:$0xff]
  %v77 = vld [vmem:[%s69 + $0x38] sm:$0xff]
  %v78 = vld [vmem:[%s69 + $0x40] sm:$0xff]
  %v79 = vld [vmem:[%s69 + $0x48] sm:$0xff]
  %v80 = vld [vmem:[%s69 + $0x50] sm:$0xff]
  %v81 = vld [vmem:[%s69 + $0x58] sm:$0xff]
  %v82 = vld [vmem:[%s69 + $0x60] sm:$0xff]
  %v83 = vld [vmem:[%s69 + $0x68] sm:$0xff]
  %v84 = vld [vmem:[%s69 + $0x70] sm:$0xff]
  %v85 = vld [vmem:[%s69 + $0x78] sm:$0xff]
  %86 = vmatprep.subr.mxu0 0.0
  %87 = vmatpush1.msra.mxu0 %v70
  %88 = vmatprep.subr.mxu0 0.0
  %89 = vmatpush1.msra.mxu0 %v71
  %90 = vmatprep.subr.mxu0 0.0
  %91 = vmatpush1.msra.mxu0 %v72
  %92 = vmatprep.subr.mxu0 0.0
  %93 = vmatpush1.msra.mxu0 %v73
  %94 = vmatprep.subr.mxu0 0.0
  %95 = vmatpush1.msra.mxu0 %v74
  %96 = vmatprep.subr.mxu0 0.0
  %97 = vmatpush1.msra.mxu0 %v75
  %98 = vmatprep.subr.mxu0 0.0
  %99 = vmatpush1.msra.mxu0 %v76
  %100 = vmatprep.subr.mxu0 0.0
  %101 = vmatpush1.msra.mxu0 %v77
  %102 = vmatprep.subr.mxu0 0.0
  %103 = vmatpush1.msra.mxu0 %v78
  %104 = vmatprep.subr.mxu0 0.0
  %105 = vmatpush1.msra.mxu0 %v79
  %106 = vmatprep.subr.mxu0 0.0
  %107 = vmatpush1.msra.mxu0 %v80
  %108 = vmatprep.subr.mxu0 0.0
  %109 = vmatpush1.msra.mxu0 %v81
  %110 = vmatprep.subr.mxu0 0.0
  %111 = vmatpush1.msra.mxu0 %v82
  %112 = vmatprep.subr.mxu0 0.0
  %113 = vmatpush1.msra.mxu0 %v83
  %114 = vmatprep.subr.mxu0 0.0
  %115 = vmatpush1.msra.mxu0 %v84
  %116 = vmatprep.subr.mxu0 0.0
  %117 = vmatpush1.msra.mxu0 %v85
  %118 = vmatprep.subr.mxu0 0.0
  %119 = vmatpush1.msra.mxu0 0.0
  %120 = vmatprep.subr.mxu0 0.0
  %121 = vmatpush1.msra.mxu0 0.0
  %122 = vmatprep.subr.mxu0 0.0
  %123 = vmatpush1.msra.mxu0 0.0
  %124 = vmatprep.subr.mxu0 0.0
  %125 = vmatpush1.msra.mxu0 0.0
  %126 = vmatprep.subr.mxu0 0.0
  %127 = vmatpush1.msra.mxu0 0.0
  %128 = vmatprep.subr.mxu0 0.0
  %129 = vmatpush1.msra.mxu0 0.0
  %130 = vmatprep.subr.mxu0 0.0
  %131 = vmatpush1.msra.mxu0 0.0
  %132 = vmatprep.subr.mxu0 0.0
  %133 = vmatpush1.msra.mxu0 0.0
  %134 = vmatprep.subr.mxu0 0.0
  %135 = vmatpush1.msra.mxu0 0.0
  %136 = vmatprep.subr.mxu0 0.0
  %137 = vmatpush1.msra.mxu0 0.0
  %138 = vmatprep.subr.mxu0 0.0
  %139 = vmatpush1.msra.mxu0 0.0
  %140 = vmatprep.subr.mxu0 0.0
  %141 = vmatpush1.msra.mxu0 0.0
  %142 = vmatprep.subr.mxu0 0.0
  %143 = vmatpush1.msra.mxu0 0.0
  %144 = vmatprep.subr.mxu0 0.0
  %145 = vmatpush1.msra.mxu0 0.0
  %146 = vmatprep.subr.mxu0 0.0
  %147 = vmatpush1.msra.mxu0 0.0
  %148 = vmatprep.subr.mxu0 0.0
  %149 = vmatpush1.msra.mxu0 0.0
  %150 = vmatprep.mubr.f32.mxu0 0.0
  %151 = vmatmul.mubr.f32.gmra.mrb[0].mxu0 %v65
  %v152 = vpop.f32.mrb[0].mxu0
  %v153 = vadd.f32 0.0, %v152
  %v154 = vpop.f32.mrb[0].mxu0
  %155 = vmatprep.mubr.f32.mxu0 0.0
  %156 = vmatmul.mubr.f32.gmra.mrb[0].mxu0 %v66
  %v157 = vpop.f32.mrb[0].mxu0
  %v158 = vadd.f32 0.0, %v157
  %v159 = vpop.f32.mrb[0].mxu0
  %160 = vmatprep.mubr.f32.mxu0 0.0
  %161 = vmatmul.mubr.f32.gmra.mrb[0].mxu0 %v67
  %v162 = vpop.f32.mrb[0].mxu0
  %v163 = vadd.f32 0.0, %v162
  %v164 = vpop.f32.mrb[0].mxu0
  %165 = vmatprep.mubr.f32.mxu0 0.0
  %166 = vmatmul.mubr.f32.gmra.mrb[0].mxu0 %v68
  %v167 = vpop.f32.mrb[0].mxu0
  %v168 = vadd.f32 0.0, %v167
  %v169 = vpop.f32.mrb[0].mxu0
  %170 = vdwg.mxu0
  %171 = vmatprep.subr.mxu0 0.0
  %172 = vmatpush1.msra.mxu0 %v49
  %173 = vmatprep.subr.mxu0 0.0
  %174 = vmatpush1.msra.mxu0 %v50
  %175 = vmatprep.subr.mxu0 0.0
  %176 = vmatpush1.msra.mxu0 %v51
  %177 = vmatprep.subr.mxu0 0.0
  %178 = vmatpush1.msra.mxu0 %v52
  %179 = vmatprep.subr.mxu0 0.0
  %180 = vmatpush1.msra.mxu0 %v53
  %181 = vmatprep.subr.mxu0 0.0
  %182 = vmatpush1.msra.mxu0 %v54
  %183 = vmatprep.subr.mxu0 0.0
  %184 = vmatpush1.msra.mxu0 %v55
  %185 = vmatprep.subr.mxu0 0.0
  %186 = vmatpush1.msra.mxu0 %v56
  %187 = vmatprep.subr.mxu0 0.0
  %188 = vmatpush1.msra.mxu0 %v57
  %189 = vmatprep.subr.mxu0 0.0
  %190 = vmatpush1.msra.mxu0 %v58
  %191 = vmatprep.subr.mxu0 0.0
  %192 = vmatpush1.msra.mxu0 %v59
  %193 = vmatprep.subr.mxu0 0.0
  %194 = vmatpush1.msra.mxu0 %v60
  %195 = vmatprep.subr.mxu0 0.0
  %196 = vmatpush1.msra.mxu0 %v61
  %197 = vmatprep.subr.mxu0 0.0
  %198 = vmatpush1.msra.mxu0 %v62
  %199 = vmatprep.subr.mxu0 0.0
  %200 = vmatpush1.msra.mxu0 %v63
  %201 = vmatprep.subr.mxu0 0.0
  %202 = vmatpush1.msra.mxu0 %v64
  %203 = vmatprep.subr.mxu0 0.0
  %204 = vmatpush1.msra.mxu0 0.0
  %205 = vmatprep.subr.mxu0 0.0
  %206 = vmatpush1.msra.mxu0 0.0
  %207 = vmatprep.subr.mxu0 0.0
  %208 = vmatpush1.msra.mxu0 0.0
  %209 = vmatprep.subr.mxu0 0.0
  %210 = vmatpush1.msra.mxu0 0.0
  %211 = vmatprep.subr.mxu0 0.0
  %212 = vmatpush1.msra.mxu0 0.0
  %213 = vmatprep.subr.mxu0 0.0
  %214 = vmatpush1.msra.mxu0 0.0
  %215 = vmatprep.subr.mxu0 0.0
  %216 = vmatpush1.msra.mxu0 0.0
  %217 = vmatprep.subr.mxu0 0.0
  %218 = vmatpush1.msra.mxu0 0.0
  %219 = vmatprep.subr.mxu0 0.0
  %220 = vmatpush1.msra.mxu0 0.0
  %221 = vmatprep.subr.mxu0 0.0
  %222 = vmatpush1.msra.mxu0 0.0
  %223 = vmatprep.subr.mxu0 0.0
  %224 = vmatpush1.msra.mxu0 0.0
  %225 = vmatprep.subr.mxu0 0.0
  %226 = vmatpush1.msra.mxu0 0.0
  %227 = vmatprep.subr.mxu0 0.0
  %228 = vmatpush1.msra.mxu0 0.0
  %229 = vmatprep.subr.mxu0 0.0
  %230 = vmatpush1.msra.mxu0 0.0
  %231 = vmatprep.subr.mxu0 0.0
  %232 = vmatpush1.msra.mxu0 0.0
  %233 = vmatprep.subr.mxu0 0.0
  %234 = vmatpush1.msra.mxu0 0.0
  %235 = vmatprep.mubr.f32.mxu0 0.0
  %236 = vmatmul.mubr.f32.gmra.mrb[0].mxu0 %v45
  %v237 = vpop.f32.mrb[0].mxu0
  %v238 = vadd.f32 %v153, %v237
  %v239 = vpop.f32.mrb[0].mxu0
  %240 = vmatprep.mubr.f32.mxu0 0.0
  %241 = vmatmul.mubr.f32.gmra.mrb[0].mxu0 %v46
  %v242 = vpop.f32.mrb[0].mxu0
  %v243 = vadd.f32 %v158, %v242
  %v244 = vpop.f32.mrb[0].mxu0
  %245 = vmatprep.mubr.f32.mxu0 0.0
  %246 = vmatmul.mubr.f32.gmra.mrb[0].mxu0 %v47
  %v247 = vpop.f32.mrb[0].mxu0
  %v248 = vadd.f32 %v163, %v247
  %v249 = vpop.f32.mrb[0].mxu0
  %250 = vmatprep.mubr.f32.mxu0 0.0
  %251 = vmatmul.mubr.f32.gmra.mrb[0].mxu0 %v48
  %v252 = vpop.f32.mrb[0].mxu0
  %v253 = vadd.f32 %v168, %v252
  %v254 = vpop.f32.mrb[0].mxu0
  %255 = vdwg.mxu0
  %v256 = vld [vmem:[%s0 + $0x2] sm:$0xff]
  %v257 = vld [vmem:[%s0 + $0xa] sm:$0xff]
  %v258 = vld [vmem:[%s0 + $0x1a] sm:$0xff]
  %v259 = vld [vmem:[%s0 + $0x22] sm:$0xff]
  %s260 = scalar_lea.vmem %s1, 256
  %v261 = vld [vmem:[%s260] sm:$0xff]
  %v262 = vld [vmem:[%s260 + $0x8] sm:$0xff]
  %v263 = vld [vmem:[%s260 + $0x10] sm:$0xff]
  %v264 = vld [vmem:[%s260 + $0x18] sm:$0xff]
  %v265 = vld [vmem:[%s260 + $0x20] sm:$0xff]
  %v266 = vld [vmem:[%s260 + $0x28] sm:$0xff]
  %v267 = vld [vmem:[%s260 + $0x30] sm:$0xff]
  %v268 = vld [vmem:[%s260 + $0x38] sm:$0xff]
  %v269 = vld [vmem:[%s260 + $0x40] sm:$0xff]
  %v270 = vld [vmem:[%s260 + $0x48] sm:$0xff]
  %v271 = vld [vmem:[%s260 + $0x50] sm:$0xff]
  %v272 = vld [vmem:[%s260 + $0x58] sm:$0xff]
  %v273 = vld [vmem:[%s260 + $0x60] sm:$0xff]
  %v274 = vld [vmem:[%s260 + $0x68] sm:$0xff]
  %v275 = vld [vmem:[%s260 + $0x70] sm:$0xff]
  %v276 = vld [vmem:[%s260 + $0x78] sm:$0xff]
  %277 = vmatprep.subr.mxu0 0.0
  %278 = vmatpush1.msra.mxu0 %v261
  %279 = vmatprep.subr.mxu0 0.0
  %280 = vmatpush1.msra.mxu0 %v262
  %281 = vmatprep.subr.mxu0 0.0
  %282 = vmatpush1.msra.mxu0 %v263
  %283 = vmatprep.subr.mxu0 0.0
  %284 = vmatpush1.msra.mxu0 %v264
  %285 = vmatprep.subr.mxu0 0.0
  %286 = vmatpush1.msra.mxu0 %v265
  %287 = vmatprep.subr.mxu0 0.0
  %288 = vmatpush1.msra.mxu0 %v266
  %289 = vmatprep.subr.mxu0 0.0
  %290 = vmatpush1.msra.mxu0 %v267
  %291 = vmatprep.subr.mxu0 0.0
  %292 = vmatpush1.msra.mxu0 %v268
  %293 = vmatprep.subr.mxu0 0.0
  %294 = vmatpush1.msra.mxu0 %v269
  %295 = vmatprep.subr.mxu0 0.0
  %296 = vmatpush1.msra.mxu0 %v270
  %297 = vmatprep.subr.mxu0 0.0
  %298 = vmatpush1.msra.mxu0 %v271
  %299 = vmatprep.subr.mxu0 0.0
  %300 = vmatpush1.msra.mxu0 %v272
  %301 = vmatprep.subr.mxu0 0.0
  %302 = vmatpush1.msra.mxu0 %v273
  %303 = vmatprep.subr.mxu0 0.0
  %304 = vmatpush1.msra.mxu0 %v274
  %305 = vmatprep.subr.mxu0 0.0
  %306 = vmatpush1.msra.mxu0 %v275
  %307 = vmatprep.subr.mxu0 0.0
  %308 = vmatpush1.msra.mxu0 %v276
  %309 = vmatprep.subr.mxu0 0.0
  %310 = vmatpush1.msra.mxu0 0.0
  %311 = vmatprep.subr.mxu0 0.0
  %312 = vmatpush1.msra.mxu0 0.0
  %313 = vmatprep.subr.mxu0 0.0
  %314 = vmatpush1.msra.mxu0 0.0
  %315 = vmatprep.subr.mxu0 0.0
  %316 = vmatpush1.msra.mxu0 0.0
  %317 = vmatprep.subr.mxu0 0.0
  %318 = vmatpush1.msra.mxu0 0.0
  %319 = vmatprep.subr.mxu0 0.0
  %320 = vmatpush1.msra.mxu0 0.0
  %321 = vmatprep.subr.mxu0 0.0
  %322 = vmatpush1.msra.mxu0 0.0
  %323 = vmatprep.subr.mxu0 0.0
  %324 = vmatpush1.msra.mxu0 0.0
  %325 = vmatprep.subr.mxu0 0.0
  %326 = vmatpush1.msra.mxu0 0.0
  %327 = vmatprep.subr.mxu0 0.0
  %328 = vmatpush1.msra.mxu0 0.0
  %329 = vmatprep.subr.mxu0 0.0
  %330 = vmatpush1.msra.mxu0 0.0
  %331 = vmatprep.subr.mxu0 0.0
  %332 = vmatpush1.msra.mxu0 0.0
  %333 = vmatprep.subr.mxu0 0.0
  %334 = vmatpush1.msra.mxu0 0.0
  %335 = vmatprep.subr.mxu0 0.0
  %336 = vmatpush1.msra.mxu0 0.0
  %337 = vmatprep.subr.mxu0 0.0
  %338 = vmatpush1.msra.mxu0 0.0
  %339 = vmatprep.subr.mxu0 0.0
  %340 = vmatpush1.msra.mxu0 0.0
  %341 = vmatprep.mubr.f32.mxu0 0.0
  %342 = vmatmul.mubr.f32.gmra.mrb[0].mxu0 %v256
  %v343 = vpop.f32.mrb[0].mxu0
  %v344 = vadd.f32 0.0, %v343
  %v345 = vpop.f32.mrb[0].mxu0
  %346 = vmatprep.mubr.f32.mxu0 0.0
  %347 = vmatmul.mubr.f32.gmra.mrb[0].mxu0 %v257
  %v348 = vpop.f32.mrb[0].mxu0
  %v349 = vadd.f32 0.0, %v348
  %v350 = vpop.f32.mrb[0].mxu0
  %351 = vmatprep.mubr.f32.mxu0 0.0
  %352 = vmatmul.mubr.f32.gmra.mrb[0].mxu0 %v258
  %v353 = vpop.f32.mrb[0].mxu0
  %v354 = vadd.f32 0.0, %v353
  %v355 = vpop.f32.mrb[0].mxu0
  %356 = vmatprep.mubr.f32.mxu0 0.0
  %357 = vmatmul.mubr.f32.gmra.mrb[0].mxu0 %v259
  %v358 = vpop.f32.mrb[0].mxu0
  %v359 = vadd.f32 0.0, %v358
  %v360 = vpop.f32.mrb[0].mxu0
  %361 = vdwg.mxu0
  %v362 = vadd.f32 %v238, %v344
  %v363 = vadd.f32 %v243, %v349
  %v364 = vadd.f32 %v248, %v354
  %v365 = vadd.f32 %v253, %v359
  %v366 = vadd.f32 %v362, %v363
  %v367 = vadd.f32 %v366, %v364
  %v368 = vadd.f32 %v367, %v365
  %v369 = vrot.slane %v368, 4
  %v370 = vadd.f32 %v368, %v369
  %v371 = vrot.slane %v370, 2
  %v372 = vadd.f32 %v370, %v371
  %v373 = vrot.slane %v372, 1
  %v374 = vadd.f32 %v372, %v373
  %v375 = vmul.f32 %v362, %v362
  %v376 = vmul.f32 %v363, %v363
  %v377 = vmul.f32 %v364, %v364
  %v378 = vmul.f32 %v365, %v365
  %v379 = vadd.f32 %v375, %v376
  %v380 = vadd.f32 %v379, %v377
  %v381 = vadd.f32 %v380, %v378
  %v382 = vrot.slane %v381, 4
  %v383 = vadd.f32 %v381, %v382
  %v384 = vrot.slane %v383, 2
  %v385 = vadd.f32 %v383, %v384
  %v386 = vrot.slane %v385, 1
  %v387 = vadd.f32 %v385, %v386
  %388 = vmatprep.subr.mxu0 0.0
  %389 = vmatpush1.msra.mxu0 %v29
  %390 = vmatprep.subr.mxu0 0.0
  %391 = vmatpush1.msra.mxu0 %v30
  %392 = vmatprep.subr.mxu0 0.0
  %393 = vmatpush1.msra.mxu0 %v31
  %394 = vmatprep.subr.mxu0 0.0
  %395 = vmatpush1.msra.mxu0 %v32
  %396 = vmatprep.subr.mxu0 0.0
  %397 = vmatpush1.msra.mxu0 %v33
  %398 = vmatprep.subr.mxu0 0.0
  %399 = vmatpush1.msra.mxu0 %v34
  %400 = vmatprep.subr.mxu0 0.0
  %401 = vmatpush1.msra.mxu0 %v35
  %402 = vmatprep.subr.mxu0 0.0
  %403 = vmatpush1.msra.mxu0 %v36
  %404 = vmatprep.subr.mxu0 0.0
  %405 = vmatpush1.msra.mxu0 %v37
  %406 = vmatprep.subr.mxu0 0.0
  %407 = vmatpush1.msra.mxu0 %v38
  %408 = vmatprep.subr.mxu0 0.0
  %409 = vmatpush1.msra.mxu0 %v39
  %410 = vmatprep.subr.mxu0 0.0
  %411 = vmatpush1.msra.mxu0 %v40
  %412 = vmatprep.subr.mxu0 0.0
  %413 = vmatpush1.msra.mxu0 %v41
  %414 = vmatprep.subr.mxu0 0.0
  %415 = vmatpush1.msra.mxu0 %v42
  %416 = vmatprep.subr.mxu0 0.0
  %417 = vmatpush1.msra.mxu0 %v43
  %418 = vmatprep.subr.mxu0 0.0
  %419 = vmatpush1.msra.mxu0 %v44
  %420 = vmatprep.subr.mxu0 0.0
  %421 = vmatpush1.msra.mxu0 0.0
  %422 = vmatprep.subr.mxu0 0.0
  %423 = vmatpush1.msra.mxu0 0.0
  %424 = vmatprep.subr.mxu0 0.0
  %425 = vmatpush1.msra.mxu0 0.0
  %426 = vmatprep.subr.mxu0 0.0
  %427 = vmatpush1.msra.mxu0 0.0
  %428 = vmatprep.subr.mxu0 0.0
  %429 = vmatpush1.msra.mxu0 0.0
  %430 = vmatprep.subr.mxu0 0.0
  %431 = vmatpush1.msra.mxu0 0.0
  %432 = vmatprep.subr.mxu0 0.0
  %433 = vmatpush1.msra.mxu0 0.0
  %434 = vmatprep.subr.mxu0 0.0
  %435 = vmatpush1.msra.mxu0 0.0
  %436 = vmatprep.subr.mxu0 0.0
  %437 = vmatpush1.msra.mxu0 0.0
  %438 = vmatprep.subr.mxu0 0.0
  %439 = vmatpush1.msra.mxu0 0.0
  %440 = vmatprep.subr.mxu0 0.0
  %441 = vmatpush1.msra.mxu0 0.0
  %442 = vmatprep.subr.mxu0 0.0
  %443 = vmatpush1.msra.mxu0 0.0
  %444 = vmatprep.subr.mxu0 0.0
  %445 = vmatpush1.msra.mxu0 0.0
  %446 = vmatprep.subr.mxu0 0.0
  %447 = vmatpush1.msra.mxu0 0.0
  %448 = vmatprep.subr.mxu0 0.0
  %449 = vmatpush1.msra.mxu0 0.0
  %450 = vmatprep.subr.mxu0 0.0
  %451 = vmatpush1.msra.mxu0 0.0
  %452 = vmatprep.mubr.f32.mxu0 0.0
  %453 = vmatmul.mubr.f32.gmra.mrb[0].mxu0 %v374
  %v454 = vpop.f32.mrb[0].mxu0
  %v455 = vadd.f32 0.0, %v454
  %v456 = vpop.f32.mrb[0].mxu0
  %457 = vdwg.mxu0
  %458 = vmatprep.subr.mxu0 0.0
  %459 = vmatpush1.msra.mxu0 %v29
  %460 = vmatprep.subr.mxu0 0.0
  %461 = vmatpush1.msra.mxu0 %v30
  %462 = vmatprep.subr.mxu0 0.0
  %463 = vmatpush1.msra.mxu0 %v31
  %464 = vmatprep.subr.mxu0 0.0
  %465 = vmatpush1.msra.mxu0 %v32
  %466 = vmatprep.subr.mxu0 0.0
  %467 = vmatpush1.msra.mxu0 %v33
  %468 = vmatprep.subr.mxu0 0.0
  %469 = vmatpush1.msra.mxu0 %v34
  %470 = vmatprep.subr.mxu0 0.0
  %471 = vmatpush1.msra.mxu0 %v35
  %472 = vmatprep.subr.mxu0 0.0
  %473 = vmatpush1.msra.mxu0 %v36
  %474 = vmatprep.subr.mxu0 0.0
  %475 = vmatpush1.msra.mxu0 %v37
  %476 = vmatprep.subr.mxu0 0.0
  %477 = vmatpush1.msra.mxu0 %v38
  %478 = vmatprep.subr.mxu0 0.0
  %479 = vmatpush1.msra.mxu0 %v39
  %480 = vmatprep.subr.mxu0 0.0
  %481 = vmatpush1.msra.mxu0 %v40
  %482 = vmatprep.subr.mxu0 0.0
  %483 = vmatpush1.msra.mxu0 %v41
  %484 = vmatprep.subr.mxu0 0.0
  %485 = vmatpush1.msra.mxu0 %v42
  %486 = vmatprep.subr.mxu0 0.0
  %487 = vmatpush1.msra.mxu0 %v43
  %488 = vmatprep.subr.mxu0 0.0
  %489 = vmatpush1.msra.mxu0 %v44
  %490 = vmatprep.subr.mxu0 0.0
  %491 = vmatpush1.msra.mxu0 0.0
  %492 = vmatprep.subr.mxu0 0.0
  %493 = vmatpush1.msra.mxu0 0.0
  %494 = vmatprep.subr.mxu0 0.0
  %495 = vmatpush1.msra.mxu0 0.0
  %496 = vmatprep.subr.mxu0 0.0
  %497 = vmatpush1.msra.mxu0 0.0
  %498 = vmatprep.subr.mxu0 0.0
  %499 = vmatpush1.msra.mxu0 0.0
  %500 = vmatprep.subr.mxu0 0.0
  %501 = vmatpush1.msra.mxu0 0.0
  %502 = vmatprep.subr.mxu0 0.0
  %503 = vmatpush1.msra.mxu0 0.0
  %504 = vmatprep.subr.mxu0 0.0
  %505 = vmatpush1.msra.mxu0 0.0
  %506 = vmatprep.subr.mxu0 0.0
  %507 = vmatpush1.msra.mxu0 0.0
  %508 = vmatprep.subr.mxu0 0.0
  %509 = vmatpush1.msra.mxu0 0.0
  %510 = vmatprep.subr.mxu0 0.0
  %511 = vmatpush1.msra.mxu0 0.0
  %512 = vmatprep.subr.mxu0 0.0
  %513 = vmatpush1.msra.mxu0 0.0
  %514 = vmatprep.subr.mxu0 0.0
  %515 = vmatpush1.msra.mxu0 0.0
  %516 = vmatprep.subr.mxu0 0.0
  %517 = vmatpush1.msra.mxu0 0.0
  %518 = vmatprep.subr.mxu0 0.0
  %519 = vmatpush1.msra.mxu0 0.0
  %520 = vmatprep.subr.mxu0 0.0
  %521 = vmatpush1.msra.mxu0 0.0
  %522 = vmatprep.mubr.f32.mxu0 0.0
  %523 = vmatmul.mubr.f32.gmra.mrb[0].mxu0 %v387
  %v524 = vpop.f32.mrb[0].mxu0
  %v525 = vadd.f32 0.0, %v524
  %v526 = vpop.f32.mrb[0].mxu0
  %527 = vdwg.mxu0
  %v528 = vmul.f32 %v455, %v455
  %v529 = vsub.f32 %v525, %v528
  %v530 = vld [vmem:[%s3] sm:$0x1]
  %v531 = vadd.f32 %v529, 1e-05
  %v532 = vrsqrt.pop %v531
  %v533 = vmul.f32 %v530, %v532
  %v534 = vld [vmem:[%s4] sm:$0x1]
  %v535 = vmul.f32 %v455, %v533
  %v536 = vsub.f32 %v534, %v535
  %v538 = vlaneseq
  %v539 = vshrl.u32 %v538, 7
  %v540 = vsub.s32 0, %v539
  %v541 = vrot.slane %v533, %v540
  %v543 = vmul.f32 %v362, %v541
  %v544 = vmul.f32 %v363, %v541
  %v545 = vmul.f32 %v364, %v541
  %v546 = vmul.f32 %v365, %v541
  %v548 = vlaneseq
  %v549 = vshrl.u32 %v548, 7
  %v550 = vsub.s32 0, %v549
  %v551 = vrot.slane %v536, %v550
  %v553 = vadd.f32 %v543, %v551
  %v554 = vadd.f32 %v544, %v551
  %v555 = vadd.f32 %v545, %v551
  %v556 = vadd.f32 %v546, %v551
  %v557 = vmax.f32 %v553, 0.0
  %v558 = vmax.f32 %v554, 0.0
  %v559 = vmax.f32 %v555, 0.0
  %v560 = vmax.f32 %v556, 0.0
  %561 = vst [vmem:[#allocation2] sm:$0xff] 0.0
  %562 = vst [vmem:[#allocation2 + $0x20] sm:$0xff] 0.0
  %563 = vst [vmem:[#allocation2 + $0x18] sm:$0xff] 0.0
  %564 = vst [vmem:[#allocation2 + $0x38] sm:$0xff] 0.0
  %565 = vst [vmem:[#allocation2 + $0x8] sm:$0xff] %v557
  %566 = vst [vmem:[#allocation2 + $0x10] sm:$0xff] %v558
  %567 = vst [vmem:[#allocation2 + $0x28] sm:$0xff] %v559
  %568 = vst [vmem:[#allocation2 + $0x30] sm:$0xff] %v560
  %v569 = vld [vmem:[#allocation2 + $0x7] sm:$0xff]
  %v570 = vld [vmem:[#allocation2 + $0xf] sm:$0xff]
  %v571 = vld [vmem:[#allocation2 + $0x27] sm:$0xff]
  %v572 = vld [vmem:[#allocation2 + $0x2f] sm:$0xff]
  %v573 = vld [vmem:[%s2] sm:$0xff]
  %v574 = vld [vmem:[%s2 + $0x8] sm:$0xff]
  %v575 = vld [vmem:[%s2 + $0x10] sm:$0xff]
  %v576 = vld [vmem:[%s2 + $0x18] sm:$0xff]
  %v577 = vld [vmem:[%s2 + $0x20] sm:$0xff]
  %v578 = vld [vmem:[%s2 + $0x28] sm:$0xff]
  %v579 = vld [vmem:[%s2 + $0x30] sm:$0xff]
  %v580 = vld [vmem:[%s2 + $0x38] sm:$0xff]
  %v581 = vld [vmem:[%s2 + $0x40] sm:$0xff]
  %v582 = vld [vmem:[%s2 + $0x48] sm:$0xff]
  %v583 = vld [vmem:[%s2 + $0x50] sm:$0xff]
  %v584 = vld [vmem:[%s2 + $0x58] sm:$0xff]
  %v585 = vld [vmem:[%s2 + $0x60] sm:$0xff]
  %v586 = vld [vmem:[%s2 + $0x68] sm:$0xff]
  %v587 = vld [vmem:[%s2 + $0x70] sm:$0xff]
  %v588 = vld [vmem:[%s2 + $0x78] sm:$0xff]
  %v589 = vld [vmem:[#allocation2 + $0x8] sm:$0xff]
  %v590 = vld [vmem:[#allocation2 + $0x10] sm:$0xff]
  %v591 = vld [vmem:[#allocation2 + $0x28] sm:$0xff]
  %v592 = vld [vmem:[#allocation2 + $0x30] sm:$0xff]
  %s593 = scalar_lea.vmem %s2, 128
  %v594 = vld [vmem:[%s593] sm:$0xff]
  %v595 = vld [vmem:[%s593 + $0x8] sm:$0xff]
  %v596 = vld [vmem:[%s593 + $0x10] sm:$0xff]
  %v597 = vld [vmem:[%s593 + $0x18] sm:$0xff]
  %v598 = vld [vmem:[%s593 + $0x20] sm:$0xff]
  %v599 = vld [vmem:[%s593 + $0x28] sm:$0xff]
  %v600 = vld [vmem:[%s593 + $0x30] sm:$0xff]
  %v601 = vld [vmem:[%s593 + $0x38] sm:$0xff]
  %v602 = vld [vmem:[%s593 + $0x40] sm:$0xff]
  %v603 = vld [vmem:[%s593 + $0x48] sm:$0xff]
  %v604 = vld [vmem:[%s593 + $0x50] sm:$0xff]
  %v605 = vld [vmem:[%s593 + $0x58] sm:$0xff]
  %v606 = vld [vmem:[%s593 + $0x60] sm:$0xff]
  %v607 = vld [vmem:[%s593 + $0x68] sm:$0xff]
  %v608 = vld [vmem:[%s593 + $0x70] sm:$0xff]
  %v609 = vld [vmem:[%s593 + $0x78] sm:$0xff]
  %610 = vmatprep.subr.mxu0 0.0
  %611 = vmatpush1.msra.mxu0 %v594
  %612 = vmatprep.subr.mxu0 0.0
  %613 = vmatpush1.msra.mxu0 %v595
  %614 = vmatprep.subr.mxu0 0.0
  %615 = vmatpush1.msra.mxu0 %v596
  %616 = vmatprep.subr.mxu0 0.0
  %617 = vmatpush1.msra.mxu0 %v597
  %618 = vmatprep.subr.mxu0 0.0
  %619 = vmatpush1.msra.mxu0 %v598
  %620 = vmatprep.subr.mxu0 0.0
  %621 = vmatpush1.msra.mxu0 %v599
  %622 = vmatprep.subr.mxu0 0.0
  %623 = vmatpush1.msra.mxu0 %v600
  %624 = vmatprep.subr.mxu0 0.0
  %625 = vmatpush1.msra.mxu0 %v601
  %626 = vmatprep.subr.mxu0 0.0
  %627 = vmatpush1.msra.mxu0 %v602
  %628 = vmatprep.subr.mxu0 0.0
  %629 = vmatpush1.msra.mxu0 %v603
  %630 = vmatprep.subr.mxu0 0.0
  %631 = vmatpush1.msra.mxu0 %v604
  %632 = vmatprep.subr.mxu0 0.0
  %633 = vmatpush1.msra.mxu0 %v605
  %634 = vmatprep.subr.mxu0 0.0
  %635 = vmatpush1.msra.mxu0 %v606
  %636 = vmatprep.subr.mxu0 0.0
  %637 = vmatpush1.msra.mxu0 %v607
  %638 = vmatprep.subr.mxu0 0.0
  %639 = vmatpush1.msra.mxu0 %v608
  %640 = vmatprep.subr.mxu0 0.0
  %641 = vmatpush1.msra.mxu0 %v609
  %642 = vmatprep.subr.mxu0 0.0
  %643 = vmatpush1.msra.mxu0 0.0
  %644 = vmatprep.subr.mxu0 0.0
  %645 = vmatpush1.msra.mxu0 0.0
  %646 = vmatprep.subr.mxu0 0.0
  %647 = vmatpush1.msra.mxu0 0.0
  %648 = vmatprep.subr.mxu0 0.0
  %649 = vmatpush1.msra.mxu0 0.0
  %650 = vmatprep.subr.mxu0 0.0
  %651 = vmatpush1.msra.mxu0 0.0
  %652 = vmatprep.subr.mxu0 0.0
  %653 = vmatpush1.msra.mxu0 0.0
  %654 = vmatprep.subr.mxu0 0.0
  %655 = vmatpush1.msra.mxu0 0.0
  %656 = vmatprep.subr.mxu0 0.0
  %657 = vmatpush1.msra.mxu0 0.0
  %658 = vmatprep.subr.mxu0 0.0
  %659 = vmatpush1.msra.mxu0 0.0
  %660 = vmatprep.subr.mxu0 0.0
  %661 = vmatpush1.msra.mxu0 0.0
  %662 = vmatprep.subr.mxu0 0.0
  %663 = vmatpush1.msra.mxu0 0.0
  %664 = vmatprep.subr.mxu0 0.0
  %665 = vmatpush1.msra.mxu0 0.0
  %666 = vmatprep.subr.mxu0 0.0
  %667 = vmatpush1.msra.mxu0 0.0
  %668 = vmatprep.subr.mxu0 0.0
  %669 = vmatpush1.msra.mxu0 0.0
  %670 = vmatprep.subr.mxu0 0.0
  %671 = vmatpush1.msra.mxu0 0.0
  %672 = vmatprep.subr.mxu0 0.0
  %673 = vmatpush1.msra.mxu0 0.0
  %674 = vmatprep.mubr.f32.mxu0 0.0
  %675 = vmatmul.mubr.f32.gmra.mrb[0].mxu0 %v589
  %v676 = vpop.f32.mrb[0].mxu0
  %v677 = vadd.f32 0.0, %v676
  %v678 = vpop.f32.mrb[0].mxu0
  %679 = vmatprep.mubr.f32.mxu0 0.0
  %680 = vmatmul.mubr.f32.gmra.mrb[0].mxu0 %v590
  %v681 = vpop.f32.mrb[0].mxu0
  %v682 = vadd.f32 0.0, %v681
  %v683 = vpop.f32.mrb[0].mxu0
  %684 = vmatprep.mubr.f32.mxu0 0.0
  %685 = vmatmul.mubr.f32.gmra.mrb[0].mxu0 %v591
  %v686 = vpop.f32.mrb[0].mxu0
  %v687 = vadd.f32 0.0, %v686
  %v688 = vpop.f32.mrb[0].mxu0
  %689 = vmatprep.mubr.f32.mxu0 0.0
  %690 = vmatmul.mubr.f32.gmra.mrb[0].mxu0 %v592
  %v691 = vpop.f32.mrb[0].mxu0
  %v692 = vadd.f32 0.0, %v691
  %v693 = vpop.f32.mrb[0].mxu0
  %694 = vdwg.mxu0
  %695 = vmatprep.subr.mxu0 0.0
  %696 = vmatpush1.msra.mxu0 %v573
  %697 = vmatprep.subr.mxu0 0.0
  %698 = vmatpush1.msra.mxu0 %v574
  %699 = vmatprep.subr.mxu0 0.0
  %700 = vmatpush1.msra.mxu0 %v575
  %701 = vmatprep.subr.mxu0 0.0
  %702 = vmatpush1.msra.mxu0 %v576
  %703 = vmatprep.subr.mxu0 0.0
  %704 = vmatpush1.msra.mxu0 %v577
  %705 = vmatprep.subr.mxu0 0.0
  %706 = vmatpush1.msra.mxu0 %v578
  %707 = vmatprep.subr.mxu0 0.0
  %708 = vmatpush1.msra.mxu0 %v579
  %709 = vmatprep.subr.mxu0 0.0
  %710 = vmatpush1.msra.mxu0 %v580
  %711 = vmatprep.subr.mxu0 0.0
  %712 = vmatpush1.msra.mxu0 %v581
  %713 = vmatprep.subr.mxu0 0.0
  %714 = vmatpush1.msra.mxu0 %v582
  %715 = vmatprep.subr.mxu0 0.0
  %716 = vmatpush1.msra.mxu0 %v583
  %717 = vmatprep.subr.mxu0 0.0
  %718 = vmatpush1.msra.mxu0 %v584
  %719 = vmatprep.subr.mxu0 0.0
  %720 = vmatpush1.msra.mxu0 %v585
  %721 = vmatprep.subr.mxu0 0.0
  %722 = vmatpush1.msra.mxu0 %v586
  %723 = vmatprep.subr.mxu0 0.0
  %724 = vmatpush1.msra.mxu0 %v587
  %725 = vmatprep.subr.mxu0 0.0
  %726 = vmatpush1.msra.mxu0 %v588
  %727 = vmatprep.subr.mxu0 0.0
  %728 = vmatpush1.msra.mxu0 0.0
  %729 = vmatprep.subr.mxu0 0.0
  %730 = vmatpush1.msra.mxu0 0.0
  %731 = vmatprep.subr.mxu0 0.0
  %732 = vmatpush1.msra.mxu0 0.0
  %733 = vmatprep.subr.mxu0 0.0
  %734 = vmatpush1.msra.mxu0 0.0
  %735 = vmatprep.subr.mxu0 0.0
  %736 = vmatpush1.msra.mxu0 0.0
  %737 = vmatprep.subr.mxu0 0.0
  %738 = vmatpush1.msra.mxu0 0.0
  %739 = vmatprep.subr.mxu0 0.0
  %740 = vmatpush1.msra.mxu0 0.0
  %741 = vmatprep.subr.mxu0 0.0
  %742 = vmatpush1.msra.mxu0 0.0
  %743 = vmatprep.subr.mxu0 0.0
  %744 = vmatpush1.msra.mxu0 0.0
  %745 = vmatprep.subr.mxu0 0.0
  %746 = vmatpush1.msra.mxu0 0.0
  %747 = vmatprep.subr.mxu0 0.0
  %748 = vmatpush1.msra.mxu0 0.0
  %749 = vmatprep.subr.mxu0 0.0
  %750 = vmatpush1.msra.mxu0 0.0
  %751 = vmatprep.subr.mxu0 0.0
  %752 = vmatpush1.msra.mxu0 0.0
  %753 = vmatprep.subr.mxu0 0.0
  %754 = vmatpush1.msra.mxu0 0.0
  %755 = vmatprep.subr.mxu0 0.0
  %756 = vmatpush1.msra.mxu0 0.0
  %757 = vmatprep.subr.mxu0 0.0
  %758 = vmatpush1.msra.mxu0 0.0
  %759 = vmatprep.mubr.f32.mxu0 0.0
  %760 = vmatmul.mubr.f32.gmra.mrb[0].mxu0 %v569
  %v761 = vpop.f32.mrb[0].mxu0
  %v762 = vadd.f32 %v677, %v761
  %v763 = vpop.f32.mrb[0].mxu0
  %764 = vmatprep.mubr.f32.mxu0 0.0
  %765 = vmatmul.mubr.f32.gmra.mrb[0].mxu0 %v570
  %v766 = vpop.f32.mrb[0].mxu0
  %v767 = vadd.f32 %v682, %v766
  %v768 = vpop.f32.mrb[0].mxu0
  %769 = vmatprep.mubr.f32.mxu0 0.0
  %770 = vmatmul.mubr.f32.gmra.mrb[0].mxu0 %v571
  %v771 = vpop.f32.mrb[0].mxu0
  %v772 = vadd.f32 %v687, %v771
  %v773 = vpop.f32.mrb[0].mxu0
  %774 = vmatprep.mubr.f32.mxu0 0.0
  %775 = vmatmul.mubr.f32.gmra.mrb[0].mxu0 %v572
  %v776 = vpop.f32.mrb[0].mxu0
  %v777 = vadd.f32 %v692, %v776
  %v778 = vpop.f32.mrb[0].mxu0
  %779 = vdwg.mxu0
  %v780 = vld [vmem:[#allocation2 + $0x9] sm:$0xff]
  %v781 = vld [vmem:[#allocation2 + $0x11] sm:$0xff]
  %v782 = vld [vmem:[#allocation2 + $0x29] sm:$0xff]
  %v783 = vld [vmem:[#allocation2 + $0x31] sm:$0xff]
  %s784 = scalar_lea.vmem %s2, 256
  %v785 = vld [vmem:[%s784] sm:$0xff]
  %v786 = vld [vmem:[%s784 + $0x8] sm:$0xff]
  %v787 = vld [vmem:[%s784 + $0x10] sm:$0xff]
  %v788 = vld [vmem:[%s784 + $0x18] sm:$0xff]
  %v789 = vld [vmem:[%s784 + $0x20] sm:$0xff]
  %v790 = vld [vmem:[%s784 + $0x28] sm:$0xff]
  %v791 = vld [vmem:[%s784 + $0x30] sm:$0xff]
  %v792 = vld [vmem:[%s784 + $0x38] sm:$0xff]
  %v793 = vld [vmem:[%s784 + $0x40] sm:$0xff]
  %v794 = vld [vmem:[%s784 + $0x48] sm:$0xff]
  %v795 = vld [vmem:[%s784 + $0x50] sm:$0xff]
  %v796 = vld [vmem:[%s784 + $0x58] sm:$0xff]
  %v797 = vld [vmem:[%s784 + $0x60] sm:$0xff]
  %v798 = vld [vmem:[%s784 + $0x68] sm:$0xff]
  %v799 = vld [vmem:[%s784 + $0x70] sm:$0xff]
  %v800 = vld [vmem:[%s784 + $0x78] sm:$0xff]
  %801 = vmatprep.subr.mxu0 0.0
  %802 = vmatpush1.msra.mxu0 %v785
  %803 = vmatprep.subr.mxu0 0.0
  %804 = vmatpush1.msra.mxu0 %v786
  %805 = vmatprep.subr.mxu0 0.0
  %806 = vmatpush1.msra.mxu0 %v787
  %807 = vmatprep.subr.mxu0 0.0
  %808 = vmatpush1.msra.mxu0 %v788
  %809 = vmatprep.subr.mxu0 0.0
  %810 = vmatpush1.msra.mxu0 %v789
  %811 = vmatprep.subr.mxu0 0.0
  %812 = vmatpush1.msra.mxu0 %v790
  %813 = vmatprep.subr.mxu0 0.0
  %814 = vmatpush1.msra.mxu0 %v791
  %815 = vmatprep.subr.mxu0 0.0
  %816 = vmatpush1.msra.mxu0 %v792
  %817 = vmatprep.subr.mxu0 0.0
  %818 = vmatpush1.msra.mxu0 %v793
  %819 = vmatprep.subr.mxu0 0.0
  %820 = vmatpush1.msra.mxu0 %v794
  %821 = vmatprep.subr.mxu0 0.0
  %822 = vmatpush1.msra.mxu0 %v795
  %823 = vmatprep.subr.mxu0 0.0
  %824 = vmatpush1.msra.mxu0 %v796
  %825 = vmatprep.subr.mxu0 0.0
  %826 = vmatpush1.msra.mxu0 %v797
  %827 = vmatprep.subr.mxu0 0.0
  %828 = vmatpush1.msra.mxu0 %v798
  %829 = vmatprep.subr.mxu0 0.0
  %830 = vmatpush1.msra.mxu0 %v799
  %831 = vmatprep.subr.mxu0 0.0
  %832 = vmatpush1.msra.mxu0 %v800
  %833 = vmatprep.subr.mxu0 0.0
  %834 = vmatpush1.msra.mxu0 0.0
  %835 = vmatprep.subr.mxu0 0.0
  %836 = vmatpush1.msra.mxu0 0.0
  %837 = vmatprep.subr.mxu0 0.0
  %838 = vmatpush1.msra.mxu0 0.0
  %839 = vmatprep.subr.mxu0 0.0
  %840 = vmatpush1.msra.mxu0 0.0
  %841 = vmatprep.subr.mxu0 0.0
  %842 = vmatpush1.msra.mxu0 0.0
  %843 = vmatprep.subr.mxu0 0.0
  %844 = vmatpush1.msra.mxu0 0.0
  %845 = vmatprep.subr.mxu0 0.0
  %846 = vmatpush1.msra.mxu0 0.0
  %847 = vmatprep.subr.mxu0 0.0
  %848 = vmatpush1.msra.mxu0 0.0
  %849 = vmatprep.subr.mxu0 0.0
  %850 = vmatpush1.msra.mxu0 0.0
  %851 = vmatprep.subr.mxu0 0.0
  %852 = vmatpush1.msra.mxu0 0.0
  %853 = vmatprep.subr.mxu0 0.0
  %854 = vmatpush1.msra.mxu0 0.0
  %855 = vmatprep.subr.mxu0 0.0
  %856 = vmatpush1.msra.mxu0 0.0
  %857 = vmatprep.subr.mxu0 0.0
  %858 = vmatpush1.msra.mxu0 0.0
  %859 = vmatprep.subr.mxu0 0.0
  %860 = vmatpush1.msra.mxu0 0.0
  %861 = vmatprep.subr.mxu0 0.0
  %862 = vmatpush1.msra.mxu0 0.0
  %863 = vmatprep.subr.mxu0 0.0
  %864 = vmatpush1.msra.mxu0 0.0
  %865 = vmatprep.mubr.f32.mxu0 0.0
  %866 = vmatmul.mubr.f32.gmra.mrb[0].mxu0 %v780
  %v867 = vpop.f32.mrb[0].mxu0
  %v868 = vadd.f32 0.0, %v867
  %v869 = vpop.f32.mrb[0].mxu0
  %870 = vmatprep.mubr.f32.mxu0 0.0
  %871 = vmatmul.mubr.f32.gmra.mrb[0].mxu0 %v781
  %v872 = vpop.f32.mrb[0].mxu0
  %v873 = vadd.f32 0.0, %v872
  %v874 = vpop.f32.mrb[0].mxu0
  %875 = vmatprep.mubr.f32.mxu0 0.0
  %876 = vmatmul.mubr.f32.gmra.mrb[0].mxu0 %v782
  %v877 = vpop.f32.mrb[0].mxu0
  %v878 = vadd.f32 0.0, %v877
  %v879 = vpop.f32.mrb[0].mxu0
  %880 = vmatprep.mubr.f32.mxu0 0.0
  %881 = vmatmul.mubr.f32.gmra.mrb[0].mxu0 %v783
  %v882 = vpop.f32.mrb[0].mxu0
  %v883 = vadd.f32 0.0, %v882
  %v884 = vpop.f32.mrb[0].mxu0
  %885 = vdwg.mxu0
  %v886 = vadd.f32 %v762, %v868
  %v887 = vadd.f32 %v767, %v873
  %v888 = vadd.f32 %v772, %v878
  %v889 = vadd.f32 %v777, %v883
  %v890 = vadd.f32 %v886, %v887
  %v891 = vadd.f32 %v890, %v888
  %v892 = vadd.f32 %v891, %v889
  %v893 = vrot.slane %v892, 4
  %v894 = vadd.f32 %v892, %v893
  %v895 = vrot.slane %v894, 2
  %v896 = vadd.f32 %v894, %v895
  %v897 = vrot.slane %v896, 1
  %v898 = vadd.f32 %v896, %v897
  %v899 = vmul.f32 %v886, %v886
  %v900 = vmul.f32 %v887, %v887
  %v901 = vmul.f32 %v888, %v888
  %v902 = vmul.f32 %v889, %v889
  %v903 = vadd.f32 %v899, %v900
  %v904 = vadd.f32 %v903, %v901
  %v905 = vadd.f32 %v904, %v902
  %v906 = vrot.slane %v905, 4
  %v907 = vadd.f32 %v905, %v906
  %v908 = vrot.slane %v907, 2
  %v909 = vadd.f32 %v907, %v908
  %v910 = vrot.slane %v909, 1
  %v911 = vadd.f32 %v909, %v910
  %912 = vmatprep.subr.mxu0 0.0
  %913 = vmatpush1.msra.mxu0 %v29
  %914 = vmatprep.subr.mxu0 0.0
  %915 = vmatpush1.msra.mxu0 %v30
  %916 = vmatprep.subr.mxu0 0.0
  %917 = vmatpush1.msra.mxu0 %v31
  %918 = vmatprep.subr.mxu0 0.0
  %919 = vmatpush1.msra.mxu0 %v32
  %920 = vmatprep.subr.mxu0 0.0
  %921 = vmatpush1.msra.mxu0 %v33
  %922 = vmatprep.subr.mxu0 0.0
  %923 = vmatpush1.msra.mxu0 %v34
  %924 = vmatprep.subr.mxu0 0.0
  %925 = vmatpush1.msra.mxu0 %v35
  %926 = vmatprep.subr.mxu0 0.0
  %927 = vmatpush1.msra.mxu0 %v36
  %928 = vmatprep.subr.mxu0 0.0
  %929 = vmatpush1.msra.mxu0 %v37
  %930 = vmatprep.subr.mxu0 0.0
  %931 = vmatpush1.msra.mxu0 %v38
  %932 = vmatprep.subr.mxu0 0.0
  %933 = vmatpush1.msra.mxu0 %v39
  %934 = vmatprep.subr.mxu0 0.0
  %935 = vmatpush1.msra.mxu0 %v40
  %936 = vmatprep.subr.mxu0 0.0
  %937 = vmatpush1.msra.mxu0 %v41
  %938 = vmatprep.subr.mxu0 0.0
  %939 = vmatpush1.msra.mxu0 %v42
  %940 = vmatprep.subr.mxu0 0.0
  %941 = vmatpush1.msra.mxu0 %v43
  %942 = vmatprep.subr.mxu0 0.0
  %943 = vmatpush1.msra.mxu0 %v44
  %944 = vmatprep.subr.mxu0 0.0
  %945 = vmatpush1.msra.mxu0 0.0
  %946 = vmatprep.subr.mxu0 0.0
  %947 = vmatpush1.msra.mxu0 0.0
  %948 = vmatprep.subr.mxu0 0.0
  %949 = vmatpush1.msra.mxu0 0.0
  %950 = vmatprep.subr.mxu0 0.0
  %951 = vmatpush1.msra.mxu0 0.0
  %952 = vmatprep.subr.mxu0 0.0
  %953 = vmatpush1.msra.mxu0 0.0
  %954 = vmatprep.subr.mxu0 0.0
  %955 = vmatpush1.msra.mxu0 0.0
  %956 = vmatprep.subr.mxu0 0.0
  %957 = vmatpush1.msra.mxu0 0.0
  %958 = vmatprep.subr.mxu0 0.0
  %959 = vmatpush1.msra.mxu0 0.0
  %960 = vmatprep.subr.mxu0 0.0
  %961 = vmatpush1.msra.mxu0 0.0
  %962 = vmatprep.subr.mxu0 0.0
  %963 = vmatpush1.msra.mxu0 0.0
  %964 = vmatprep.subr.mxu0 0.0
  %965 = vmatpush1.msra.mxu0 0.0
  %966 = vmatprep.subr.mxu0 0.0
  %967 = vmatpush1.msra.mxu0 0.0
  %968 = vmatprep.subr.mxu0 0.0
  %969 = vmatpush1.msra.mxu0 0.0
  %970 = vmatprep.subr.mxu0 0.0
  %971 = vmatpush1.msra.mxu0 0.0
  %972 = vmatprep.subr.mxu0 0.0
  %973 = vmatpush1.msra.mxu0 0.0
  %974 = vmatprep.subr.mxu0 0.0
  %975 = vmatpush1.msra.mxu0 0.0
  %976 = vmatprep.mubr.f32.mxu0 0.0
  %977 = vmatmul.mubr.f32.gmra.mrb[0].mxu0 %v898
  %v978 = vpop.f32.mrb[0].mxu0
  %v979 = vadd.f32 0.0, %v978
  %v980 = vpop.f32.mrb[0].mxu0
  %981 = vdwg.mxu0
  %982 = vmatprep.subr.mxu0 0.0
  %983 = vmatpush1.msra.mxu0 %v29
  %984 = vmatprep.subr.mxu0 0.0
  %985 = vmatpush1.msra.mxu0 %v30
  %986 = vmatprep.subr.mxu0 0.0
  %987 = vmatpush1.msra.mxu0 %v31
  %988 = vmatprep.subr.mxu0 0.0
  %989 = vmatpush1.msra.mxu0 %v32
  %990 = vmatprep.subr.mxu0 0.0
  %991 = vmatpush1.msra.mxu0 %v33
  %992 = vmatprep.subr.mxu0 0.0
  %993 = vmatpush1.msra.mxu0 %v34
  %994 = vmatprep.subr.mxu0 0.0
  %995 = vmatpush1.msra.mxu0 %v35
  %996 = vmatprep.subr.mxu0 0.0
  %997 = vmatpush1.msra.mxu0 %v36
  %998 = vmatprep.subr.mxu0 0.0
  %999 = vmatpush1.msra.mxu0 %v37
  %1000 = vmatprep.subr.mxu0 0.0
  %1001 = vmatpush1.msra.mxu0 %v38
  %1002 = vmatprep.subr.mxu0 0.0
  %1003 = vmatpush1.msra.mxu0 %v39
  %1004 = vmatprep.subr.mxu0 0.0
  %1005 = vmatpush1.msra.mxu0 %v40
  %1006 = vmatprep.subr.mxu0 0.0
  %1007 = vmatpush1.msra.mxu0 %v41
  %1008 = vmatprep.subr.mxu0 0.0
  %1009 = vmatpush1.msra.mxu0 %v42
  %1010 = vmatprep.subr.mxu0 0.0
  %1011 = vmatpush1.msra.mxu0 %v43
  %1012 = vmatprep.subr.mxu0 0.0
  %1013 = vmatpush1.msra.mxu0 %v44
  %1014 = vmatprep.subr.mxu0 0.0
  %1015 = vmatpush1.msra.mxu0 0.0
  %1016 = vmatprep.subr.mxu0 0.0
  %1017 = vmatpush1.msra.mxu0 0.0
  %1018 = vmatprep.subr.mxu0 0.0
  %1019 = vmatpush1.msra.mxu0 0.0
  %1020 = vmatprep.subr.mxu0 0.0
  %1021 = vmatpush1.msra.mxu0 0.0
  %1022 = vmatprep.subr.mxu0 0.0
  %1023 = vmatpush1.msra.mxu0 0.0
  %1024 = vmatprep.subr.mxu0 0.0
  %1025 = vmatpush1.msra.mxu0 0.0
  %1026 = vmatprep.subr.mxu0 0.0
  %1027 = vmatpush1.msra.mxu0 0.0
  %1028 = vmatprep.subr.mxu0 0.0
  %1029 = vmatpush1.msra.mxu0 0.0
  %1030 = vmatprep.subr.mxu0 0.0
  %1031 = vmatpush1.msra.mxu0 0.0
  %1032 = vmatprep.subr.mxu0 0.0
  %1033 = vmatpush1.msra.mxu0 0.0
  %1034 = vmatprep.subr.mxu0 0.0
  %1035 = vmatpush1.msra.mxu0 0.0
  %1036 = vmatprep.subr.mxu0 0.0
  %1037 = vmatpush1.msra.mxu0 0.0
  %1038 = vmatprep.subr.mxu0 0.0
  %1039 = vmatpush1.msra.mxu0 0.0
  %1040 = vmatprep.subr.mxu0 0.0
  %1041 = vmatpush1.msra.mxu0 0.0
  %1042 = vmatprep.subr.mxu0 0.0
  %1043 = vmatpush1.msra.mxu0 0.0
  %1044 = vmatprep.subr.mxu0 0.0
  %1045 = vmatpush1.msra.mxu0 0.0
  %1046 = vmatprep.mubr.f32.mxu0 0.0
  %1047 = vmatmul.mubr.f32.gmra.mrb[0].mxu0 %v911
  %v1048 = vpop.f32.mrb[0].mxu0
  %v1049 = vadd.f32 0.0, %v1048
  %v1050 = vpop.f32.mrb[0].mxu0
  %1051 = vdwg.mxu0
  %v1052 = vmul.f32 %v979, %v979
  %v1053 = vsub.f32 %v1049, %v1052
  %v1054 = vld [vmem:[%s5] sm:$0x1]
  %v1055 = vadd.f32 %v1053, 1e-05
  %v1056 = vrsqrt.pop %v1055
  %v1057 = vmul.f32 %v1054, %v1056
  %v1058 = vld [vmem:[%s6] sm:$0x1]
  %v1059 = vmul.f32 %v979, %v1057
  %v1060 = vsub.f32 %v1058, %v1059
  %v1062 = vlaneseq
  %v1063 = vshrl.u32 %v1062, 7
  %v1064 = vsub.s32 0, %v1063
  %v1065 = vrot.slane %v1057, %v1064
  %v1067 = vmul.f32 %v886, %v1065
  %v1068 = vmul.f32 %v887, %v1065
  %v1069 = vmul.f32 %v888, %v1065
  %v1070 = vmul.f32 %v889, %v1065
  %v1072 = vlaneseq
  %v1073 = vshrl.u32 %v1072, 7
  %v1074 = vsub.s32 0, %v1073
  %v1075 = vrot.slane %v1060, %v1074
  %v1077 = vadd.f32 %v1067, %v1075
  %v1078 = vadd.f32 %v1068, %v1075
  %v1079 = vadd.f32 %v1069, %v1075
  %v1080 = vadd.f32 %v1070, %v1075
  %v1081 = vld [vmem:[%s0 + $0x1] sm:$0xff]
  %v1082 = vld [vmem:[%s0 + $0x9] sm:$0xff]
  %v1083 = vld [vmem:[%s0 + $0x19] sm:$0xff]
  %v1084 = vld [vmem:[%s0 + $0x21] sm:$0xff]
  %v1085 = vadd.f32 %v1077, %v1081
  %v1086 = vadd.f32 %v1078, %v1082
  %v1087 = vadd.f32 %v1079, %v1083
  %v1088 = vadd.f32 %v1080, %v1084
  %v1089 = vmax.f32 %v1085, 0.0
  %v1090 = vmax.f32 %v1086, 0.0
  %v1091 = vmax.f32 %v1087, 0.0
  %v1092 = vmax.f32 %v1088, 0.0
  %1093 = vst [vmem:[%s8] sm:$0xff] %v1089
  %1094 = vst [vmem:[%s8 + $0x8] sm:$0xff] %v1090
  %1095 = vst [vmem:[%s8 + $0x10] sm:$0xff] %v1091
  %1096 = vst [vmem:[%s8 + $0x18] sm:$0xff] %v1092
  // Predicated region
  $region34: #{basic_block_forward.1} parent=0 // pred_check
    _
  $region35: #{basic_block_forward.1} parent=0 // pred_check_branch
    %1098 = sbr.rel (0) target = $region37
  $region36: #{basic_block_forward.1} parent=0 // pred_region
    _
  $region37: #{basic_block_forward.1} parent=0 // pred_fallthru
    _
  // Predicated region
  $region38: #{basic_block_forward.1} parent=0 // pred_check
    _
  $region39: #{basic_block_forward.1} parent=0 // pred_check_branch
    %1100 = sbr.rel (0) target = $region41
  $region40: #{basic_block_forward.1} parent=0 // pred_region
    _
  $region41: #{basic_block_forward.1} parent=0 // pred_fallthru
    _

</llo_original>
